<compile_context>
chip_gen: v5e
topology: v5e:2x2
jax: 0.10.0
libtpu: 0.0.40
codegen_flags: <defaults>
</compile_context>

<pallas_src>
import functools

import jax
import jax.numpy as jnp
from jax.experimental import pallas as pl
from jax.experimental.pallas import tpu as pltpu  # noqa: F401  (kept for TPU lowering)


# ---------------------------------------------------------------- config ----
class MistralConfig:
    n_embd = 32
    n_head = 4
    n_kv_head = 2
    head_dim = 8           # n_embd == n_head * head_dim
    block_size = 8
    window_size = 4
    dropout = 0.0
    bias = False
    lora = False
    quant = False
    rope_theta = 10000.0


# ------------------------------------------------------ fused fwd kernel ----
def _fused_mistral_attention_kernel(
    x_ref, w_ref, wo_ref, cos_q_ref, sin_q_ref, cos_k_ref, sin_k_ref, o_ref,
    *, B, T, H, KV, D, window_size):
    """Whole forward pass (fused QKV+rot proj -> RoPE -> SWA attention -> O proj).

    x_ref     : (B*T, C)                          f32
    w_ref     : (C, 2*H*D + 3*KV*D)               f32  columns = q|q_rot|k|k_rot|v,
                                                       q/q_rot pre-scaled by 1/sqrt(D)
    wo_ref    : (H*D, C)                          f32  (pre-transposed)
    cos_q_ref : (B*T, H*D)   sin_q_ref: (B*T, H*D)
    cos_k_ref : (B*T, KV*D)  sin_k_ref: (B*T, KV*D)
    o_ref     : (B*T, C)
    """
    x = x_ref[...]

    # One MXU matmul producing [q | rot_half(q) | k | rot_half(k) | v].
    proj = jnp.dot(x, w_ref[...], preferred_element_type=jnp.float32)

    HD = H * D
    KVD = KV * D
    rep = H // KV

    q     = proj[:, 0:HD]
    q_rot = proj[:, HD:2 * HD]
    k     = proj[:, 2 * HD:2 * HD + KVD]
    k_rot = proj[:, 2 * HD + KVD:2 * HD + 2 * KVD]
    v     = proj[:, 2 * HD + 2 * KVD:2 * HD + 3 * KVD]

    # RoPE as two slab-wide FMAs (rotate-half already produced by the matmul).
    q = q * cos_q_ref[...] + q_rot * sin_q_ref[...]      # (B*T, H*D)
    k = k * cos_k_ref[...] + k_rot * sin_k_ref[...]      # (B*T, KV*D)

    # Sliding-window causal additive bias, generated in-kernel:
    # allowed iff key_pos <= query_pos and (query_pos - key_pos) < window_size.
    qpos = jax.lax.broadcasted_iota(jnp.int32, (T, T), 0)
    kpos = jax.lax.broadcasted_iota(jnp.int32, (T, T), 1)
    allowed = (kpos <= qpos) & ((qpos - kpos) < window_size)
    bias = jnp.where(allowed, 0.0, -1e30).astype(jnp.float32)      # (T, T)

    per_batch = []
    for b in range(B):                       # static loops: traced straight-line
        r0 = b * T
        qb = q[r0:r0 + T, :]
        kb = k[r0:r0 + T, :]
        vb = v[r0:r0 + T, :]
        head_outs = []
        for g in range(KV):                  # kv head (GQA group)
            k_h = kb[:, g * D:(g + 1) * D]   # (T, D), RoPE'd once per kv head
            v_h = vb[:, g * D:(g + 1) * D]
            for r in range(rep):             # query heads sharing this kv head
                h = g * rep + r
                q_h = qb[:, h * D:(h + 1) * D]           # already scaled by 1/sqrt(D)
                s = jnp.dot(q_h, k_h.T, preferred_element_type=jnp.float32) + bias
                m = jnp.max(s, axis=-1, keepdims=True)
                p = jnp.exp(s - m)
                l = jnp.sum(p, axis=-1, keepdims=True)
                pv = jnp.dot(p, v_h, preferred_element_type=jnp.float32)      # (T, D)
                # post-PV normalization: D-wide multiply, reciprocal on the EUP.
                head_outs.append(pv * pl.reciprocal(l, approx=True))
        per_batch.append(jnp.concatenate(head_outs, axis=-1))       # (T, H*D)

    attn = jnp.concatenate(per_batch, axis=0)                       # (B*T, H*D)

    # Output projection fused into the same kernel.
    o_ref[...] = jnp.dot(attn, wo_ref[...],
                         preferred_element_type=jnp.float32).astype(o_ref.dtype)


# ----------------------------------------------------------- full forward ----
def _rot_half_weight(w, n_heads, head_dim):
    """w: (n_heads*head_dim, C) PyTorch layout.  Returns w_rot such that
    x @ w_rot.T == rotate_half(x @ w.T) applied per head (sign folded in)."""
    w3 = w.reshape(n_heads, head_dim, -1)
    hd2 = head_dim // 2
    return jnp.concatenate([-w3[:, hd2:, :], w3[:, :hd2, :]], axis=1).reshape(
        n_heads * head_dim, -1)


def mistral_attention(x, params, cfg):
    B, T, C = x.shape
    H, KV, D = cfg.n_head, cfg.n_kv_head, cfg.head_dim
    HD, KVD = H * D, KV * D
    proj_dim = 2 * HD + 3 * KVD

    # --- one-time parameter prep (done once at load time in practice) ---------
    # PyTorch (out, in) layout -> (in, out); q|q_rot|k|k_rot|v concatenated so the
    # QKV projection AND the rotate-half permutation run in a single MXU matmul.
    scale = 1.0 / (D ** 0.5)
    wq, wk, wv, wo = params["wq"], params["wk"], params["wv"], params["wo"]
    w_fused = jnp.concatenate(
        [(wq * scale).T,
         (_rot_half_weight(wq, H, D) * scale).T,
         wk.T,
         _rot_half_weight(wk, KV, D).T,
         wv.T], axis=1).astype(jnp.float32)                 # (C, proj_dim)
    wo_t = wo.T.astype(jnp.float32)                         # (H*D, C)

    # --- RoPE tables (rotate-half, theta=10000), pre-tiled over batch & heads --
    inv_freq = 1.0 / (cfg.rope_theta ** (jnp.arange(0, D, 2, dtype=jnp.float32) / D))
    t = jnp.arange(T, dtype=jnp.float32)
    emb = jnp.concatenate([jnp.outer(t, inv_freq)] * 2, axis=-1)    # (T, D)
    cos, sin = jnp.cos(emb), jnp.sin(emb)
    cos_q = jnp.tile(cos, (B, H)).astype(jnp.float32)               # (B*T, H*D)
    sin_q = jnp.tile(sin, (B, H)).astype(jnp.float32)
    cos_k = jnp.tile(cos, (B, KV)).astype(jnp.float32)              # (B*T, KV*D)
    sin_k = jnp.tile(sin, (B, KV)).astype(jnp.float32)

    x2d = x.reshape(B * T, C).astype(jnp.float32)

    kernel = functools.partial(
        _fused_mistral_attention_kernel,
        B=B, T=T, H=H, KV=KV, D=D, window_size=cfg.window_size)

    out2d = pl.pallas_call(
        kernel,
        out_shape=jax.ShapeDtypeStruct((B * T, C), x.dtype),
        in_specs=[
            pl.BlockSpec((B * T, C), lambda: (0, 0)),
            pl.BlockSpec((C, proj_dim), lambda: (0, 0)),
            pl.BlockSpec((HD, C), lambda: (0, 0)),
            pl.BlockSpec((B * T, HD), lambda: (0, 0)),
            pl.BlockSpec((B * T, HD), lambda: (0, 0)),
            pl.BlockSpec((B * T, KVD), lambda: (0, 0)),
            pl.BlockSpec((B * T, KVD), lambda: (0, 0)),
        ],
        out_specs=pl.BlockSpec((B * T, C), lambda: (0, 0)),
    )(x2d, w_fused, wo_t, cos_q, sin_q, cos_k, sin_k)

    # resid_dropout / attn_dropout with p=0.0 -> identity.
    return out2d.reshape(B, T, C)


# -------------------------------------------------- pure-JAX reference ------
def mistral_attention_ref(x, params, cfg):
    B, T, C = x.shape
    H, KV, D = cfg.n_head, cfg.n_kv_head, cfg.head_dim
    rep = H // KV
    x2d = x.reshape(B * T, C)
    q = (x2d @ params["wq"].T).reshape(B, T, H, D).transpose(0, 2, 1, 3)
    k = (x2d @ params["wk"].T).reshape(B, T, KV, D).transpose(0, 2, 1, 3)
    v = (x2d @ params["wv"].T).reshape(B, T, KV, D).transpose(0, 2, 1, 3)

    inv_freq = 1.0 / (cfg.rope_theta ** (jnp.arange(0, D, 2, dtype=jnp.float32) / D))
    t = jnp.arange(T, dtype=jnp.float32)
    emb = jnp.concatenate([jnp.outer(t, inv_freq)] * 2, axis=-1)
    cos, sin = jnp.cos(emb), jnp.sin(emb)

    def rot_half(u):
        return jnp.concatenate([-u[..., D // 2:], u[..., :D // 2]], axis=-1)

    q = q * cos + rot_half(q) * sin
    k = k * cos + rot_half(k) * sin
    k = jnp.repeat(k, rep, axis=1)       # torch.repeat_interleave(dim=1)
    v = jnp.repeat(v, rep, axis=1)

    scores = (q @ jnp.swapaxes(k, -1, -2)) / (D ** 0.5)
    i = jnp.arange(T)[:, None]
    j = jnp.arange(T)[None, :]
    mask = (j <= i) & ((i - j) < cfg.window_size)
    scores = jnp.where(mask[None, None], scores, -jnp.inf)
    w = jax.nn.softmax(scores, axis=-1)
    attn = (w @ v).transpose(0, 2, 1, 3).reshape(B * T, H * D)
    return (attn @ params["wo"].T).reshape(B, T, C)


# -------------------------------------------------------------------- main ---
if __name__ == "__main__":
    cfg = MistralConfig()
    B, T, C = 2, cfg.block_size, cfg.n_embd

    key = jax.random.PRNGKey(0)
    kx, kq, kk, kv, ko = jax.random.split(key, 5)

    x = jax.random.normal(kx, (B, T, C), dtype=jnp.float32)
    params = {
        # PyTorch nn.Linear weight layout: (out_features, in_features), bias=False
        "wq": 0.02 * jax.random.normal(kq, (cfg.n_head * cfg.head_dim, C), jnp.float32),
        "wk": 0.02 * jax.random.normal(kk, (cfg.n_kv_head * cfg.head_dim, C), jnp.float32),
        "wv": 0.02 * jax.random.normal(kv, (cfg.n_kv_head * cfg.head_dim, C), jnp.float32),
        "wo": 0.02 * jax.random.normal(ko, (C, cfg.n_head * cfg.head_dim), jnp.float32),
    }

    out = mistral_attention(x, params, cfg)
    jax.block_until_ready(out)
    assert out.shape == (B, T, C)
    assert bool(jnp.all(jnp.isfinite(out)))

    ref = mistral_attention_ref(x, params, cfg)
    assert jnp.allclose(out, ref, atol=2e-3, rtol=2e-2)

    print("KERNEL_OK")
</pallas_src>

<mosaic_0001>
module attributes {stable_mosaic.version = 11 : i64} {
  func.func @_fused_mistral_attention_kernel(%arg0: memref<16x32xf32, #tpu.memory_space<vmem>>, %arg1: memref<32x112xf32, #tpu.memory_space<vmem>>, %arg2: memref<32x32xf32, #tpu.memory_space<vmem>>, %arg3: memref<16x32xf32, #tpu.memory_space<vmem>>, %arg4: memref<16x32xf32, #tpu.memory_space<vmem>>, %arg5: memref<16x16xf32, #tpu.memory_space<vmem>>, %arg6: memref<16x16xf32, #tpu.memory_space<vmem>>, %arg7: memref<16x32xf32, #tpu.memory_space<vmem>>) attributes {dimension_semantics = [], scalar_prefetch = 0 : i64, scratch_operands = 0 : i64, tpu.core_type = #tpu.core_type<tc>} {
    %c0 = arith.constant 0 : index
    %c0_0 = arith.constant 0 : index
    %0 = vector.load %arg0[%c0, %c0_0] : memref<16x32xf32, #tpu.memory_space<vmem>>, vector<16x32xf32>
    %c0_1 = arith.constant 0 : index
    %c0_2 = arith.constant 0 : index
    %1 = vector.load %arg1[%c0_1, %c0_2] : memref<32x112xf32, #tpu.memory_space<vmem>>, vector<32x112xf32>
    %cst = arith.constant dense<0.000000e+00> : vector<16x112xf32>
    %2 = tpu.matmul %0, %1, %cst {dimension_numbers = #tpu.dot_dimension_numbers<[1], [0], [0], [1], [0, 0, 1, 1], [], []>} : vector<16x32xf32>, vector<32x112xf32>, vector<16x112xf32> -> vector<16x112xf32>
    %3 = vector.extract_strided_slice %2 {offsets = [0, 0], sizes = [16, 32], strides = [1, 1]} : vector<16x112xf32> to vector<16x32xf32>
    %4 = vector.extract_strided_slice %2 {offsets = [0, 32], sizes = [16, 32], strides = [1, 1]} : vector<16x112xf32> to vector<16x32xf32>
    %5 = vector.extract_strided_slice %2 {offsets = [0, 64], sizes = [16, 16], strides = [1, 1]} : vector<16x112xf32> to vector<16x16xf32>
    %6 = vector.extract_strided_slice %2 {offsets = [0, 80], sizes = [16, 16], strides = [1, 1]} : vector<16x112xf32> to vector<16x16xf32>
    %7 = vector.extract_strided_slice %2 {offsets = [0, 96], sizes = [16, 16], strides = [1, 1]} : vector<16x112xf32> to vector<16x16xf32>
    %c0_3 = arith.constant 0 : index
    %c0_4 = arith.constant 0 : index
    %8 = vector.load %arg3[%c0_3, %c0_4] : memref<16x32xf32, #tpu.memory_space<vmem>>, vector<16x32xf32>
    %9 = arith.mulf %3, %8 : vector<16x32xf32>
    %c0_5 = arith.constant 0 : index
    %c0_6 = arith.constant 0 : index
    %10 = vector.load %arg4[%c0_5, %c0_6] : memref<16x32xf32, #tpu.memory_space<vmem>>, vector<16x32xf32>
    %11 = arith.mulf %4, %10 : vector<16x32xf32>
    %12 = arith.addf %9, %11 : vector<16x32xf32>
    %c0_7 = arith.constant 0 : index
    %c0_8 = arith.constant 0 : index
    %13 = vector.load %arg5[%c0_7, %c0_8] : memref<16x16xf32, #tpu.memory_space<vmem>>, vector<16x16xf32>
    %14 = arith.mulf %5, %13 : vector<16x16xf32>
    %c0_9 = arith.constant 0 : index
    %c0_10 = arith.constant 0 : index
    %15 = vector.load %arg6[%c0_9, %c0_10] : memref<16x16xf32, #tpu.memory_space<vmem>>, vector<16x16xf32>
    %16 = arith.mulf %6, %15 : vector<16x16xf32>
    %17 = arith.addf %14, %16 : vector<16x16xf32>
    %18 = tpu.iota {dimensions = array<i32: 0>} : vector<8x8xi32>
    %19 = tpu.iota {dimensions = array<i32: 1>} : vector<8x8xi32>
    %20 = arith.cmpi sle, %19, %18 : vector<8x8xi32>
    %21 = arith.subi %18, %19 : vector<8x8xi32>
    %c4_i32 = arith.constant 4 : i32
    %22 = vector.broadcast %c4_i32 : i32 to vector<8x8xi32>
    %23 = arith.cmpi slt, %21, %22 : vector<8x8xi32>
    %24 = arith.andi %20, %23 : vector<8x8xi1>
    %cst_11 = arith.constant 0.000000e+00 : f32
    %cst_12 = arith.constant -1.000000e+30 : f32
    %25 = vector.broadcast %cst_11 : f32 to vector<8x8xf32>
    %26 = vector.broadcast %cst_12 : f32 to vector<8x8xf32>
    %27 = arith.select %24, %25, %26 : vector<8x8xi1>, vector<8x8xf32>
    %28 = vector.extract_strided_slice %12 {offsets = [0, 0], sizes = [8, 32], strides = [1, 1]} : vector<16x32xf32> to vector<8x32xf32>
    %29 = vector.extract_strided_slice %17 {offsets = [0, 0], sizes = [8, 16], strides = [1, 1]} : vector<16x16xf32> to vector<8x16xf32>
    %30 = vector.extract_strided_slice %7 {offsets = [0, 0], sizes = [8, 16], strides = [1, 1]} : vector<16x16xf32> to vector<8x16xf32>
    %31 = vector.extract_strided_slice %29 {offsets = [0, 0], sizes = [8, 8], strides = [1, 1]} : vector<8x16xf32> to vector<8x8xf32>
    %32 = vector.extract_strided_slice %30 {offsets = [0, 0], sizes = [8, 8], strides = [1, 1]} : vector<8x16xf32> to vector<8x8xf32>
    %33 = vector.extract_strided_slice %28 {offsets = [0, 0], sizes = [8, 8], strides = [1, 1]} : vector<8x32xf32> to vector<8x8xf32>
    %34 = tpu.transpose %31, [1, 0] : vector<8x8xf32> -> vector<8x8xf32>
    %cst_13 = arith.constant dense<0.000000e+00> : vector<8x8xf32>
    %35 = tpu.matmul %33, %34, %cst_13 {dimension_numbers = #tpu.dot_dimension_numbers<[1], [0], [0], [1], [0, 0, 1, 1], [], []>} : vector<8x8xf32>, vector<8x8xf32>, vector<8x8xf32> -> vector<8x8xf32>
    %36 = arith.addf %35, %27 : vector<8x8xf32>
    %cst_14 = arith.constant dense<0xFF800000> : vector<8xf32>
    %37 = vector.multi_reduction <maximumf>, %36, %cst_14 [1] : vector<8x8xf32> to vector<8xf32>
    %38 = vector.shape_cast %37 : vector<8xf32> to vector<8x1xf32>
    %39 = vector.broadcast %38 : vector<8x1xf32> to vector<8x8xf32>
    %40 = arith.subf %36, %39 : vector<8x8xf32>
    %41 = math.exp %40 : vector<8x8xf32>
    %cst_15 = arith.constant dense<0.000000e+00> : vector<8xf32>
    %42 = vector.multi_reduction <add>, %41, %cst_15 [1] : vector<8x8xf32> to vector<8xf32>
    %43 = vector.shape_cast %42 : vector<8xf32> to vector<8x1xf32>
    %cst_16 = arith.constant dense<0.000000e+00> : vector<8x8xf32>
    %44 = tpu.matmul %41, %32, %cst_16 {dimension_numbers = #tpu.dot_dimension_numbers<[1], [0], [0], [1], [0, 0, 1, 1], [], []>} : vector<8x8xf32>, vector<8x8xf32>, vector<8x8xf32> -> vector<8x8xf32>
    %45 = tpu.reciprocal %43 {approx = true} : vector<8x1xf32> -> vector<8x1xf32>
    %46 = vector.broadcast %45 : vector<8x1xf32> to vector<8x8xf32>
    %47 = arith.mulf %44, %46 : vector<8x8xf32>
    %48 = vector.extract_strided_slice %28 {offsets = [0, 8], sizes = [8, 8], strides = [1, 1]} : vector<8x32xf32> to vector<8x8xf32>
    %49 = tpu.transpose %31, [1, 0] : vector<8x8xf32> -> vector<8x8xf32>
    %cst_17 = arith.constant dense<0.000000e+00> : vector<8x8xf32>
    %50 = tpu.matmul %48, %49, %cst_17 {dimension_numbers = #tpu.dot_dimension_numbers<[1], [0], [0], [1], [0, 0, 1, 1], [], []>} : vector<8x8xf32>, vector<8x8xf32>, vector<8x8xf32> -> vector<8x8xf32>
    %51 = arith.addf %50, %27 : vector<8x8xf32>
    %cst_18 = arith.constant dense<0xFF800000> : vector<8xf32>
    %52 = vector.multi_reduction <maximumf>, %51, %cst_18 [1] : vector<8x8xf32> to vector<8xf32>
    %53 = vector.shape_cast %52 : vector<8xf32> to vector<8x1xf32>
    %54 = vector.broadcast %53 : vector<8x1xf32> to vector<8x8xf32>
    %55 = arith.subf %51, %54 : vector<8x8xf32>
    %56 = math.exp %55 : vector<8x8xf32>
    %cst_19 = arith.constant dense<0.000000e+00> : vector<8xf32>
    %57 = vector.multi_reduction <add>, %56, %cst_19 [1] : vector<8x8xf32> to vector<8xf32>
    %58 = vector.shape_cast %57 : vector<8xf32> to vector<8x1xf32>
    %cst_20 = arith.constant dense<0.000000e+00> : vector<8x8xf32>
    %59 = tpu.matmul %56, %32, %cst_20 {dimension_numbers = #tpu.dot_dimension_numbers<[1], [0], [0], [1], [0, 0, 1, 1], [], []>} : vector<8x8xf32>, vector<8x8xf32>, vector<8x8xf32> -> vector<8x8xf32>
    %60 = tpu.reciprocal %58 {approx = true} : vector<8x1xf32> -> vector<8x1xf32>
    %61 = vector.broadcast %60 : vector<8x1xf32> to vector<8x8xf32>
    %62 = arith.mulf %59, %61 : vector<8x8xf32>
    %63 = vector.extract_strided_slice %29 {offsets = [0, 8], sizes = [8, 8], strides = [1, 1]} : vector<8x16xf32> to vector<8x8xf32>
    %64 = vector.extract_strided_slice %30 {offsets = [0, 8], sizes = [8, 8], strides = [1, 1]} : vector<8x16xf32> to vector<8x8xf32>
    %65 = vector.extract_strided_slice %28 {offsets = [0, 16], sizes = [8, 8], strides = [1, 1]} : vector<8x32xf32> to vector<8x8xf32>
    %66 = tpu.transpose %63, [1, 0] : vector<8x8xf32> -> vector<8x8xf32>
    %cst_21 = arith.constant dense<0.000000e+00> : vector<8x8xf32>
    %67 = tpu.matmul %65, %66, %cst_21 {dimension_numbers = #tpu.dot_dimension_numbers<[1], [0], [0], [1], [0, 0, 1, 1], [], []>} : vector<8x8xf32>, vector<8x8xf32>, vector<8x8xf32> -> vector<8x8xf32>
    %68 = arith.addf %67, %27 : vector<8x8xf32>
    %cst_22 = arith.constant dense<0xFF800000> : vector<8xf32>
    %69 = vector.multi_reduction <maximumf>, %68, %cst_22 [1] : vector<8x8xf32> to vector<8xf32>
    %70 = vector.shape_cast %69 : vector<8xf32> to vector<8x1xf32>
    %71 = vector.broadcast %70 : vector<8x1xf32> to vector<8x8xf32>
    %72 = arith.subf %68, %71 : vector<8x8xf32>
    %73 = math.exp %72 : vector<8x8xf32>
    %cst_23 = arith.constant dense<0.000000e+00> : vector<8xf32>
    %74 = vector.multi_reduction <add>, %73, %cst_23 [1] : vector<8x8xf32> to vector<8xf32>
    %75 = vector.shape_cast %74 : vector<8xf32> to vector<8x1xf32>
    %cst_24 = arith.constant dense<0.000000e+00> : vector<8x8xf32>
    %76 = tpu.matmul %73, %64, %cst_24 {dimension_numbers = #tpu.dot_dimension_numbers<[1], [0], [0], [1], [0, 0, 1, 1], [], []>} : vector<8x8xf32>, vector<8x8xf32>, vector<8x8xf32> -> vector<8x8xf32>
    %77 = tpu.reciprocal %75 {approx = true} : vector<8x1xf32> -> vector<8x1xf32>
    %78 = vector.broadcast %77 : vector<8x1xf32> to vector<8x8xf32>
    %79 = arith.mulf %76, %78 : vector<8x8xf32>
    %80 = vector.extract_strided_slice %28 {offsets = [0, 24], sizes = [8, 8], strides = [1, 1]} : vector<8x32xf32> to vector<8x8xf32>
    %81 = tpu.transpose %63, [1, 0] : vector<8x8xf32> -> vector<8x8xf32>
    %cst_25 = arith.constant dense<0.000000e+00> : vector<8x8xf32>
    %82 = tpu.matmul %80, %81, %cst_25 {dimension_numbers = #tpu.dot_dimension_numbers<[1], [0], [0], [1], [0, 0, 1, 1], [], []>} : vector<8x8xf32>, vector<8x8xf32>, vector<8x8xf32> -> vector<8x8xf32>
    %83 = arith.addf %82, %27 : vector<8x8xf32>
    %cst_26 = arith.constant dense<0xFF800000> : vector<8xf32>
    %84 = vector.multi_reduction <maximumf>, %83, %cst_26 [1] : vector<8x8xf32> to vector<8xf32>
    %85 = vector.shape_cast %84 : vector<8xf32> to vector<8x1xf32>
    %86 = vector.broadcast %85 : vector<8x1xf32> to vector<8x8xf32>
    %87 = arith.subf %83, %86 : vector<8x8xf32>
    %88 = math.exp %87 : vector<8x8xf32>
    %cst_27 = arith.constant dense<0.000000e+00> : vector<8xf32>
    %89 = vector.multi_reduction <add>, %88, %cst_27 [1] : vector<8x8xf32> to vector<8xf32>
    %90 = vector.shape_cast %89 : vector<8xf32> to vector<8x1xf32>
    %cst_28 = arith.constant dense<0.000000e+00> : vector<8x8xf32>
    %91 = tpu.matmul %88, %64, %cst_28 {dimension_numbers = #tpu.dot_dimension_numbers<[1], [0], [0], [1], [0, 0, 1, 1], [], []>} : vector<8x8xf32>, vector<8x8xf32>, vector<8x8xf32> -> vector<8x8xf32>
    %92 = tpu.reciprocal %90 {approx = true} : vector<8x1xf32> -> vector<8x1xf32>
    %93 = vector.broadcast %92 : vector<8x1xf32> to vector<8x8xf32>
    %94 = arith.mulf %91, %93 : vector<8x8xf32>
    %95 = tpu.concatenate %47, %62, %79, %94 in 1 : vector<8x8xf32>, vector<8x8xf32>, vector<8x8xf32>, vector<8x8xf32> -> vector<8x32xf32>
    %96 = vector.extract_strided_slice %12 {offsets = [8, 0], sizes = [8, 32], strides = [1, 1]} : vector<16x32xf32> to vector<8x32xf32>
    %97 = vector.extract_strided_slice %17 {offsets = [8, 0], sizes = [8, 16], strides = [1, 1]} : vector<16x16xf32> to vector<8x16xf32>
    %98 = vector.extract_strided_slice %7 {offsets = [8, 0], sizes = [8, 16], strides = [1, 1]} : vector<16x16xf32> to vector<8x16xf32>
    %99 = vector.extract_strided_slice %97 {offsets = [0, 0], sizes = [8, 8], strides = [1, 1]} : vector<8x16xf32> to vector<8x8xf32>
    %100 = vector.extract_strided_slice %98 {offsets = [0, 0], sizes = [8, 8], strides = [1, 1]} : vector<8x16xf32> to vector<8x8xf32>
    %101 = vector.extract_strided_slice %96 {offsets = [0, 0], sizes = [8, 8], strides = [1, 1]} : vector<8x32xf32> to vector<8x8xf32>
    %102 = tpu.transpose %99, [1, 0] : vector<8x8xf32> -> vector<8x8xf32>
    %cst_29 = arith.constant dense<0.000000e+00> : vector<8x8xf32>
    %103 = tpu.matmul %101, %102, %cst_29 {dimension_numbers = #tpu.dot_dimension_numbers<[1], [0], [0], [1], [0, 0, 1, 1], [], []>} : vector<8x8xf32>, vector<8x8xf32>, vector<8x8xf32> -> vector<8x8xf32>
    %104 = arith.addf %103, %27 : vector<8x8xf32>
    %cst_30 = arith.constant dense<0xFF800000> : vector<8xf32>
    %105 = vector.multi_reduction <maximumf>, %104, %cst_30 [1] : vector<8x8xf32> to vector<8xf32>
    %106 = vector.shape_cast %105 : vector<8xf32> to vector<8x1xf32>
    %107 = vector.broadcast %106 : vector<8x1xf32> to vector<8x8xf32>
    %108 = arith.subf %104, %107 : vector<8x8xf32>
    %109 = math.exp %108 : vector<8x8xf32>
    %cst_31 = arith.constant dense<0.000000e+00> : vector<8xf32>
    %110 = vector.multi_reduction <add>, %109, %cst_31 [1] : vector<8x8xf32> to vector<8xf32>
    %111 = vector.shape_cast %110 : vector<8xf32> to vector<8x1xf32>
    %cst_32 = arith.constant dense<0.000000e+00> : vector<8x8xf32>
    %112 = tpu.matmul %109, %100, %cst_32 {dimension_numbers = #tpu.dot_dimension_numbers<[1], [0], [0], [1], [0, 0, 1, 1], [], []>} : vector<8x8xf32>, vector<8x8xf32>, vector<8x8xf32> -> vector<8x8xf32>
    %113 = tpu.reciprocal %111 {approx = true} : vector<8x1xf32> -> vector<8x1xf32>
    %114 = vector.broadcast %113 : vector<8x1xf32> to vector<8x8xf32>
    %115 = arith.mulf %112, %114 : vector<8x8xf32>
    %116 = vector.extract_strided_slice %96 {offsets = [0, 8], sizes = [8, 8], strides = [1, 1]} : vector<8x32xf32> to vector<8x8xf32>
    %117 = tpu.transpose %99, [1, 0] : vector<8x8xf32> -> vector<8x8xf32>
    %cst_33 = arith.constant dense<0.000000e+00> : vector<8x8xf32>
    %118 = tpu.matmul %116, %117, %cst_33 {dimension_numbers = #tpu.dot_dimension_numbers<[1], [0], [0], [1], [0, 0, 1, 1], [], []>} : vector<8x8xf32>, vector<8x8xf32>, vector<8x8xf32> -> vector<8x8xf32>
    %119 = arith.addf %118, %27 : vector<8x8xf32>
    %cst_34 = arith.constant dense<0xFF800000> : vector<8xf32>
    %120 = vector.multi_reduction <maximumf>, %119, %cst_34 [1] : vector<8x8xf32> to vector<8xf32>
    %121 = vector.shape_cast %120 : vector<8xf32> to vector<8x1xf32>
    %122 = vector.broadcast %121 : vector<8x1xf32> to vector<8x8xf32>
    %123 = arith.subf %119, %122 : vector<8x8xf32>
    %124 = math.exp %123 : vector<8x8xf32>
    %cst_35 = arith.constant dense<0.000000e+00> : vector<8xf32>
    %125 = vector.multi_reduction <add>, %124, %cst_35 [1] : vector<8x8xf32> to vector<8xf32>
    %126 = vector.shape_cast %125 : vector<8xf32> to vector<8x1xf32>
    %cst_36 = arith.constant dense<0.000000e+00> : vector<8x8xf32>
    %127 = tpu.matmul %124, %100, %cst_36 {dimension_numbers = #tpu.dot_dimension_numbers<[1], [0], [0], [1], [0, 0, 1, 1], [], []>} : vector<8x8xf32>, vector<8x8xf32>, vector<8x8xf32> -> vector<8x8xf32>
    %128 = tpu.reciprocal %126 {approx = true} : vector<8x1xf32> -> vector<8x1xf32>
    %129 = vector.broadcast %128 : vector<8x1xf32> to vector<8x8xf32>
    %130 = arith.mulf %127, %129 : vector<8x8xf32>
    %131 = vector.extract_strided_slice %97 {offsets = [0, 8], sizes = [8, 8], strides = [1, 1]} : vector<8x16xf32> to vector<8x8xf32>
    %132 = vector.extract_strided_slice %98 {offsets = [0, 8], sizes = [8, 8], strides = [1, 1]} : vector<8x16xf32> to vector<8x8xf32>
    %133 = vector.extract_strided_slice %96 {offsets = [0, 16], sizes = [8, 8], strides = [1, 1]} : vector<8x32xf32> to vector<8x8xf32>
    %134 = tpu.transpose %131, [1, 0] : vector<8x8xf32> -> vector<8x8xf32>
    %cst_37 = arith.constant dense<0.000000e+00> : vector<8x8xf32>
    %135 = tpu.matmul %133, %134, %cst_37 {dimension_numbers = #tpu.dot_dimension_numbers<[1], [0], [0], [1], [0, 0, 1, 1], [], []>} : vector<8x8xf32>, vector<8x8xf32>, vector<8x8xf32> -> vector<8x8xf32>
    %136 = arith.addf %135, %27 : vector<8x8xf32>
    %cst_38 = arith.constant dense<0xFF800000> : vector<8xf32>
    %137 = vector.multi_reduction <maximumf>, %136, %cst_38 [1] : vector<8x8xf32> to vector<8xf32>
    %138 = vector.shape_cast %137 : vector<8xf32> to vector<8x1xf32>
    %139 = vector.broadcast %138 : vector<8x1xf32> to vector<8x8xf32>
    %140 = arith.subf %136, %139 : vector<8x8xf32>
    %141 = math.exp %140 : vector<8x8xf32>
    %cst_39 = arith.constant dense<0.000000e+00> : vector<8xf32>
    %142 = vector.multi_reduction <add>, %141, %cst_39 [1] : vector<8x8xf32> to vector<8xf32>
    %143 = vector.shape_cast %142 : vector<8xf32> to vector<8x1xf32>
    %cst_40 = arith.constant dense<0.000000e+00> : vector<8x8xf32>
    %144 = tpu.matmul %141, %132, %cst_40 {dimension_numbers = #tpu.dot_dimension_numbers<[1], [0], [0], [1], [0, 0, 1, 1], [], []>} : vector<8x8xf32>, vector<8x8xf32>, vector<8x8xf32> -> vector<8x8xf32>
    %145 = tpu.reciprocal %143 {approx = true} : vector<8x1xf32> -> vector<8x1xf32>
    %146 = vector.broadcast %145 : vector<8x1xf32> to vector<8x8xf32>
    %147 = arith.mulf %144, %146 : vector<8x8xf32>
    %148 = vector.extract_strided_slice %96 {offsets = [0, 24], sizes = [8, 8], strides = [1, 1]} : vector<8x32xf32> to vector<8x8xf32>
    %149 = tpu.transpose %131, [1, 0] : vector<8x8xf32> -> vector<8x8xf32>
    %cst_41 = arith.constant dense<0.000000e+00> : vector<8x8xf32>
    %150 = tpu.matmul %148, %149, %cst_41 {dimension_numbers = #tpu.dot_dimension_numbers<[1], [0], [0], [1], [0, 0, 1, 1], [], []>} : vector<8x8xf32>, vector<8x8xf32>, vector<8x8xf32> -> vector<8x8xf32>
    %151 = arith.addf %150, %27 : vector<8x8xf32>
    %cst_42 = arith.constant dense<0xFF800000> : vector<8xf32>
    %152 = vector.multi_reduction <maximumf>, %151, %cst_42 [1] : vector<8x8xf32> to vector<8xf32>
    %153 = vector.shape_cast %152 : vector<8xf32> to vector<8x1xf32>
    %154 = vector.broadcast %153 : vector<8x1xf32> to vector<8x8xf32>
    %155 = arith.subf %151, %154 : vector<8x8xf32>
    %156 = math.exp %155 : vector<8x8xf32>
    %cst_43 = arith.constant dense<0.000000e+00> : vector<8xf32>
    %157 = vector.multi_reduction <add>, %156, %cst_43 [1] : vector<8x8xf32> to vector<8xf32>
    %158 = vector.shape_cast %157 : vector<8xf32> to vector<8x1xf32>
    %cst_44 = arith.constant dense<0.000000e+00> : vector<8x8xf32>
    %159 = tpu.matmul %156, %132, %cst_44 {dimension_numbers = #tpu.dot_dimension_numbers<[1], [0], [0], [1], [0, 0, 1, 1], [], []>} : vector<8x8xf32>, vector<8x8xf32>, vector<8x8xf32> -> vector<8x8xf32>
    %160 = tpu.reciprocal %158 {approx = true} : vector<8x1xf32> -> vector<8x1xf32>
    %161 = vector.broadcast %160 : vector<8x1xf32> to vector<8x8xf32>
    %162 = arith.mulf %159, %161 : vector<8x8xf32>
    %163 = tpu.concatenate %115, %130, %147, %162 in 1 : vector<8x8xf32>, vector<8x8xf32>, vector<8x8xf32>, vector<8x8xf32> -> vector<8x32xf32>
    %164 = tpu.concatenate %95, %163 in 0 : vector<8x32xf32>, vector<8x32xf32> -> vector<16x32xf32>
    %c0_45 = arith.constant 0 : index
    %c0_46 = arith.constant 0 : index
    %165 = vector.load %arg2[%c0_45, %c0_46] : memref<32x32xf32, #tpu.memory_space<vmem>>, vector<32x32xf32>
    %cst_47 = arith.constant dense<0.000000e+00> : vector<16x32xf32>
    %166 = tpu.matmul %164, %165, %cst_47 {dimension_numbers = #tpu.dot_dimension_numbers<[1], [0], [0], [1], [0, 0, 1, 1], [], []>} : vector<16x32xf32>, vector<32x32xf32>, vector<16x32xf32> -> vector<16x32xf32>
    %c0_48 = arith.constant 0 : index
    %c0_49 = arith.constant 0 : index
    %167 = vector.load %arg7[%c0_48, %c0_49] : memref<16x32xf32, #tpu.memory_space<vmem>>, vector<16x32xf32>
    tpu.vector_store %arg7[%c0_48, %c0_49], %166 {strides = array<i32>} : memref<16x32xf32, #tpu.memory_space<vmem>>, vector<16x32xf32>,
    return
  }
}

</mosaic_0001>

<llo_original>
// kernel: tpu_custom_call.1
$region0: #{tpu_custom_call.1}
  #allocation0 [shape = 'u32[]', space=smem, size = 0x4, offset = 0x4, fixed_abs, tag = 'smem constant byte address 0x4 - core index']
  #allocation1 [shape = 'u32[72,128]{1,0:T(1,128)}', space=vmem, size = 0x9000, scoped, tag = 'internal scratch']
  %s0 = inlined_call_operand.hbm [shape: f32[16,32], index: 0, kind: input, shape index: {}]
  %s1 = inlined_call_operand.hbm [shape: f32[32,112], index: 1, kind: input, shape index: {}]
  %s2 = inlined_call_operand.hbm [shape: f32[32,32], index: 2, kind: input, shape index: {}]
  %s3 = inlined_call_operand.hbm [shape: f32[16,32], index: 3, kind: input, shape index: {}]
  %s4 = inlined_call_operand.hbm [shape: f32[16,32], index: 4, kind: input, shape index: {}]
  %s5 = inlined_call_operand.hbm [shape: f32[16,16], index: 5, kind: input, shape index: {}]
  %s6 = inlined_call_operand.hbm [shape: f32[16,16], index: 6, kind: input, shape index: {}]
  %s7 = inlined_call_operand.hbm [shape: f32[16,32], index: 7, kind: output, shape index: {}]
  %s8 = sld [smem:[#allocation0]]
  $region66: #{tpu_custom_call.1} parent=0
    _
  %s10 = ssub.s32 1, %s8
  %s11 = scalar_select 0, %s10, %s8
  $region1: #{tpu_custom_call.1} parent=0
    #allocation2 [shape = 'u8[8192]{0}', space=vmem, size = 0x2000, scoped, tag = 'input window, operand 0, single buffered']
    #allocation3 [shape = 's32[1]{0}', space=sflag, size = 0x4, scoped, tag = 'scoped memory for tpu_custom_call.1']
    #allocation4 [shape = 's32[1]{0}', space=sflag, size = 0x4, scoped, tag = 'scoped memory for tpu_custom_call.1']
    #allocation5 [shape = 'u8[16384]{0}', space=vmem, size = 0x4000, scoped, tag = 'input window, operand 1, single buffered']
    #allocation6 [shape = 's32[1]{0}', space=sflag, size = 0x4, scoped, tag = 'scoped memory for tpu_custom_call.1']
    #allocation7 [shape = 'u8[16384]{0}', space=vmem, size = 0x4000, scoped, tag = 'input window, operand 2, single buffered']
    #allocation8 [shape = 'u8[8192]{0}', space=vmem, size = 0x2000, scoped, tag = 'input window, operand 3, single buffered']
    #allocation9 [shape = 's32[1]{0}', space=sflag, size = 0x4, scoped, tag = 'scoped memory for tpu_custom_call.1']
    #allocation10 [shape = 'u8[8192]{0}', space=vmem, size = 0x2000, scoped, tag = 'input window, operand 4, single buffered']
    #allocation11 [shape = 'u8[8192]{0}', space=vmem, size = 0x2000, scoped, tag = 'input window, operand 5, single buffered']
    #allocation12 [shape = 's32[1]{0}', space=sflag, size = 0x4, scoped, tag = 'scoped memory for tpu_custom_call.1']
    #allocation13 [shape = 'u8[8192]{0}', space=vmem, size = 0x2000, scoped, tag = 'input window, operand 6, single buffered']
    #allocation14 [shape = 'u8[8192]{0}', space=vmem, size = 0x2000, scoped, tag = 'output window, operand 0, single buffered']
    %12 = vsyncpa [#allocation3], 0
    %13 = vsyncpa [#allocation6], 0
    %14 = vsyncpa [#allocation9], 0
    %15 = vsyncpa [#allocation12], 0
    %16 = vsyncpa [#allocation4], 0
    // Predicated region
    $region2: #{tpu_custom_call.1} parent=1 // pred_check
      _
    $region3: #{tpu_custom_call.1} parent=1 // pred_check_branch
      %18 = sbr.rel (0) target = $region5
    $region4: #{tpu_custom_call.1} parent=1 // pred_region
      %20 = vsyncadd [#allocation3], 0
      %s21 = sshll.u32 %s0, 4
      %s22 = int_to_ptr.hbm [resolvable:$true] %s21
      %s23 = sshll.u32 [#allocation2], 4
      %s24 = int_to_ptr.vmem [resolvable:$true] %s23
      %29 = dma.hbm_to_vmem [thread:$0]  %s22, 256, %s24, [#allocation3], 128, 128, 8
    $region5: #{tpu_custom_call.1} parent=1 // pred_fallthru
      _
    // Predicated region
    $region6: #{tpu_custom_call.1} parent=1 // pred_check
      _
    $region7: #{tpu_custom_call.1} parent=1 // pred_check_branch
      %31 = sbr.rel (0) target = $region9
    $region8: #{tpu_custom_call.1} parent=1 // pred_region
      %33 = vsyncadd [#allocation6], 0
      %s34 = sshll.u32 %s1, 4
      %s35 = int_to_ptr.hbm [resolvable:$true] %s34
      %s36 = sshll.u32 [#allocation5], 4
      %s37 = int_to_ptr.vmem [resolvable:$true] %s36
      %42 = dma.hbm_to_vmem [thread:$0]  %s35, 512, %s37, [#allocation6], 128, 128, 8
    $region9: #{tpu_custom_call.1} parent=1 // pred_fallthru
      _
    // Predicated region
    $region10: #{tpu_custom_call.1} parent=1 // pred_check
      _
    $region11: #{tpu_custom_call.1} parent=1 // pred_check_branch
      %44 = sbr.rel (0) target = $region13
    $region12: #{tpu_custom_call.1} parent=1 // pred_region
      %46 = vsyncadd [#allocation6], 0
      %s47 = sshll.u32 %s2, 4
      %s48 = int_to_ptr.hbm [resolvable:$true] %s47
      %s49 = sshll.u32 [#allocation7], 4
      %s50 = int_to_ptr.vmem [resolvable:$true] %s49
      %55 = dma.hbm_to_vmem [thread:$0]  %s48, 512, %s50, [#allocation6], 128, 128, 8
    $region13: #{tpu_custom_call.1} parent=1 // pred_fallthru
      _
    // Predicated region
    $region14: #{tpu_custom_call.1} parent=1 // pred_check
      _
    $region15: #{tpu_custom_call.1} parent=1 // pred_check_branch
      %57 = sbr.rel (0) target = $region17
    $region16: #{tpu_custom_call.1} parent=1 // pred_region
      %59 = vsyncadd [#allocation9], 0
      %s60 = sshll.u32 %s3, 4
      %s61 = int_to_ptr.hbm [resolvable:$true] %s60
      %s62 = sshll.u32 [#allocation8], 4
      %s63 = int_to_ptr.vmem [resolvable:$true] %s62
      %68 = dma.hbm_to_vmem [thread:$0]  %s61, 256, %s63, [#allocation9], 128, 128, 8
    $region17: #{tpu_custom_call.1} parent=1 // pred_fallthru
      _
    // Predicated region
    $region18: #{tpu_custom_call.1} parent=1 // pred_check
      _
    $region19: #{tpu_custom_call.1} parent=1 // pred_check_branch
      %70 = sbr.rel (0) target = $region21
    $region20: #{tpu_custom_call.1} parent=1 // pred_region
      %72 = vsyncadd [#allocation9], 0
      %s73 = sshll.u32 %s4, 4
      %s74 = int_to_ptr.hbm [resolvable:$true] %s73
      %s75 = sshll.u32 [#allocation10], 4
      %s76 = int_to_ptr.vmem [resolvable:$true] %s75
      %81 = dma.hbm_to_vmem [thread:$0]  %s74, 256, %s76, [#allocation9], 128, 128, 8
    $region21: #{tpu_custom_call.1} parent=1 // pred_fallthru
      _
    // Predicated region
    $region22: #{tpu_custom_call.1} parent=1 // pred_check
      _
    $region23: #{tpu_custom_call.1} parent=1 // pred_check_branch
      %83 = sbr.rel (0) target = $region25
    $region24: #{tpu_custom_call.1} parent=1 // pred_region
      %85 = vsyncadd [#allocation12], 0
      %s86 = sshll.u32 %s5, 4
      %s87 = int_to_ptr.hbm [resolvable:$true] %s86
      %s88 = sshll.u32 [#allocation11], 4
      %s89 = int_to_ptr.vmem [resolvable:$true] %s88
      %94 = dma.hbm_to_vmem [thread:$0]  %s87, 256, %s89, [#allocation12], 128, 128, 8
    $region25: #{tpu_custom_call.1} parent=1 // pred_fallthru
      _
    // Predicated region
    $region26: #{tpu_custom_call.1} parent=1 // pred_check
      _
    $region27: #{tpu_custom_call.1} parent=1 // pred_check_branch
      %96 = sbr.rel (0) target = $region29
    $region28: #{tpu_custom_call.1} parent=1 // pred_region
      %98 = vsyncadd [#allocation12], 0
      %s99 = sshll.u32 %s6, 4
      %s100 = int_to_ptr.hbm [resolvable:$true] %s99
      %s101 = sshll.u32 [#allocation13], 4
      %s102 = int_to_ptr.vmem [resolvable:$true] %s101
      %107 = dma.hbm_to_vmem [thread:$0]  %s100, 256, %s102, [#allocation12], 128, 128, 8
    $region29: #{tpu_custom_call.1} parent=1 // pred_fallthru
      _
    // Predicated region
    $region30: #{tpu_custom_call.1} parent=1 // pred_check
      _
    $region31: #{tpu_custom_call.1} parent=1 // pred_check_branch
      %109 = sbr.rel (0) target = $region33
    $region32: #{tpu_custom_call.1} parent=1 // pred_region
      %111 = dma.done [#allocation3], 256
    $region33: #{tpu_custom_call.1} parent=1 // pred_fallthru
      _
    // Predicated region
    $region34: #{tpu_custom_call.1} parent=1 // pred_check
      _
    $region35: #{tpu_custom_call.1} parent=1 // pred_check_branch
      %113 = sbr.rel (0) target = $region37
    $region36: #{tpu_custom_call.1} parent=1 // pred_region
      %115 = dma.done [#allocation6], 512
    $region37: #{tpu_custom_call.1} parent=1 // pred_fallthru
      _
    // Predicated region
    $region38: #{tpu_custom_call.1} parent=1 // pred_check
      _
    $region39: #{tpu_custom_call.1} parent=1 // pred_check_branch
      %117 = sbr.rel (0) target = $region41
    $region40: #{tpu_custom_call.1} parent=1 // pred_region
      %119 = dma.done [#allocation6], 512
    $region41: #{tpu_custom_call.1} parent=1 // pred_fallthru
      _
    // Predicated region
    $region42: #{tpu_custom_call.1} parent=1 // pred_check
      _
    $region43: #{tpu_custom_call.1} parent=1 // pred_check_branch
      %121 = sbr.rel (0) target = $region45
    $region44: #{tpu_custom_call.1} parent=1 // pred_region
      %123 = dma.done [#allocation9], 256
    $region45: #{tpu_custom_call.1} parent=1 // pred_fallthru
      _
    // Predicated region
    $region46: #{tpu_custom_call.1} parent=1 // pred_check
      _
    $region47: #{tpu_custom_call.1} parent=1 // pred_check_branch
      %125 = sbr.rel (0) target = $region49
    $region48: #{tpu_custom_call.1} parent=1 // pred_region
      %127 = dma.done [#allocation9], 256
    $region49: #{tpu_custom_call.1} parent=1 // pred_fallthru
      _
    // Predicated region
    $region50: #{tpu_custom_call.1} parent=1 // pred_check
      _
    $region51: #{tpu_custom_call.1} parent=1 // pred_check_branch
      %129 = sbr.rel (0) target = $region53
    $region52: #{tpu_custom_call.1} parent=1 // pred_region
      %131 = dma.done [#allocation12], 256
    $region53: #{tpu_custom_call.1} parent=1 // pred_fallthru
      _
    // Predicated region
    $region54: #{tpu_custom_call.1} parent=1 // pred_check
      _
    $region55: #{tpu_custom_call.1} parent=1 // pred_check_branch
      %133 = sbr.rel (0) target = $region57
    $region56: #{tpu_custom_call.1} parent=1 // pred_region
      %135 = dma.done [#allocation12], 256
    $region57: #{tpu_custom_call.1} parent=1 // pred_fallthru
      _
    %v136 = vld [vmem:[#allocation2] sm:$0xff]
    %v137 = vld [vmem:[#allocation2 + $0x8] sm:$0xff]
    %v138 = vld [vmem:[#allocation5] sm:$0xff]
    %v139 = vld [vmem:[#allocation5 + $0x8] sm:$0xff]
    %v140 = vld [vmem:[#allocation5 + $0x10] sm:$0xff]
    %v141 = vld [vmem:[#allocation5 + $0x18] sm:$0xff]
    %vm142 = vcmask 261120
    %v144 = vsel %vm142, %v136, 0
    %v147 = vsel %vm142, %v137, 0
    %149 = vmatpush.msra.mxu0 0.0
    %150 = vmatpush.msra.mxu0 0.0
    %151 = vmatpush.msra.mxu0 0.0
    %152 = vmatpush.msra.mxu0 0.0
    %153 = vmatpush.msra.mxu0 0.0
    %154 = vmatpush.msra.mxu0 0.0
    %155 = vmatpush.msra.mxu0 0.0
    %156 = vmatpush.msra.mxu0 0.0
    %157 = vmatpush.msra.mxu0 0.0
    %158 = vmatpush.msra.mxu0 0.0
    %159 = vmatpush.msra.mxu0 0.0
    %160 = vmatpush.msra.mxu0 0.0
    %161 = vmatpush.msra.mxu0 %v141
    %162 = vmatpush.msra.mxu0 %v140
    %163 = vmatpush.msra.mxu0 %v139
    %164 = vmatpush.msra.mxu0 %v138
    %165 = vmatmul.f32.gmra.mxu0 %v144
    %v166 = vpop.f32.mrf.mxu0
    %v167 = vadd.f32 0.0, %v166
    %168 = vmatmul.f32.gmra.mxu0 %v147
    %v169 = vpop.f32.mrf.mxu0
    %v170 = vadd.f32 0.0, %v169
    %171 = vdwg.mxu0
    %v172 = vld [vmem:[#allocation8] sm:$0xff]
    %v173 = vld [vmem:[#allocation8 + $0x8] sm:$0xff]
    %v174 = vmul.f32 %v167, %v172
    %v175 = vmul.f32 %v170, %v173
    %v176 = vld [vmem:[#allocation10] sm:$0xff]
    %v177 = vld [vmem:[#allocation10 + $0x8] sm:$0xff]
    %180 = vrot.lane.b32.xlu0 %v176, 32
    %v181 = vpop.permute.xlu0 %180
    %182 = vrot.lane.b32.xlu0 %v177, 32
    %v183 = vpop.permute.xlu0 %182
    %v186 = vmul.f32 %v167, %v181
    %v187 = vmul.f32 %v170, %v183
    %190 = vrot.lane.b32.xlu0 %v186, 96
    %v191 = vpop.permute.xlu0 %190
    %192 = vrot.lane.b32.xlu0 %v187, 96
    %v193 = vpop.permute.xlu0 %192
    %v196 = vadd.f32 %v174, %v191
    %v197 = vadd.f32 %v175, %v193
    %v198 = vld [vmem:[#allocation11] sm:$0xff]
    %v199 = vld [vmem:[#allocation11 + $0x8] sm:$0xff]
    %202 = vrot.lane.b32.xlu0 %v198, 64
    %v203 = vpop.permute.xlu0 %202
    %204 = vrot.lane.b32.xlu0 %v199, 64
    %v205 = vpop.permute.xlu0 %204
    %v208 = vmul.f32 %v167, %v203
    %v209 = vmul.f32 %v170, %v205
    %v210 = vld [vmem:[#allocation13] sm:$0xff]
    %v211 = vld [vmem:[#allocation13 + $0x8] sm:$0xff]
    %214 = vrot.lane.b32.xlu0 %v210, 80
    %v215 = vpop.permute.xlu0 %214
    %216 = vrot.lane.b32.xlu0 %v211, 80
    %v217 = vpop.permute.xlu0 %216
    %v220 = vmul.f32 %v167, %v215
    %v221 = vmul.f32 %v170, %v217
    %224 = vrot.lane.b32.xlu0 %v220, 112
    %v225 = vpop.permute.xlu0 %224
    %226 = vrot.lane.b32.xlu0 %v221, 112
    %v227 = vpop.permute.xlu0 %226
    %v230 = vadd.f32 %v208, %v225
    %v231 = vadd.f32 %v209, %v227
    %v232 = vlaneseq
    %v233 = vshrl.u32 %v232, 7
    %v234 = vlaneseq
    %v235 = vand.u32 %v234, 127
    %vm236 = vcmp.le.s32.totalorder %v235, %v233
    %v237 = vsub.s32 %v233, %v235
    %vm238 = vcmp.lt.s32.totalorder %v237, 4
    %vm239 = vmand %vm236, %vm238
    %v240 = vsel %vm239, 0.0, -1e+30
    %242 = vrot.lane.b32.xlu0 %v230, 64
    %v243 = vpop.permute.xlu0 %242
    %vm244 = vcmask 64512
    %v246 = vsel %vm244, %v196, 0
    %v248 = vsel %vm244, %v243, 0
    %250 = vmatpush.xpose.msra.mxu0 0.0
    %251 = vmatpush.xpose.msra.mxu0 0.0
    %252 = vmatpush.xpose.msra.mxu0 0.0
    %253 = vmatpush.xpose.msra.mxu0 0.0
    %254 = vmatpush.xpose.msra.mxu0 0.0
    %255 = vmatpush.xpose.msra.mxu0 0.0
    %256 = vmatpush.xpose.msra.mxu0 0.0
    %257 = vmatpush.xpose.msra.mxu0 0.0
    %258 = vmatpush.xpose.msra.mxu0 0.0
    %259 = vmatpush.xpose.msra.mxu0 0.0
    %260 = vmatpush.xpose.msra.mxu0 0.0
    %261 = vmatpush.xpose.msra.mxu0 0.0
    %262 = vmatpush.xpose.msra.mxu0 0.0
    %263 = vmatpush.xpose.msra.mxu0 0.0
    %264 = vmatpush.xpose.msra.mxu0 0.0
    %265 = vmatpush.xpose.msra.mxu0 %v248
    %266 = vmatmul.f32.gmra.mxu0 %v246
    %v267 = vpop.f32.mrf.mxu0
    %v268 = vadd.f32 %v240, %v267
    %269 = vdwg.mxu0
    %v270 = vsel %vm244, %v268, -inf
    %271 = vmax.xlane.f32.xlu0 %v270
    %v272 = vpop.xlane.xlu0 %271
    %v273 = vsub.f32 %v268, %v272
    %v274 = vmul.f32 %v273, 1.442695
    %v275 = vpow.pop %v274
    %v276 = vsel %vm244, %v275, 0.0
    %277 = vadd.xlane.f32.xlu0 %v276
    %v278 = vpop.xlane.xlu0 %277
    %280 = vrot.lane.b32.xlu0 %v167, 32
    %v281 = vpop.permute.xlu0 %280
    %v284 = vsel %vm244, %v275, 0
    %286 = vmatpush.msra.mxu0 0.0
    %287 = vmatpush.msra.mxu0 0.0
    %288 = vmatpush.msra.mxu0 0.0
    %289 = vmatpush.msra.mxu0 0.0
    %290 = vmatpush.msra.mxu0 0.0
    %291 = vmatpush.msra.mxu0 0.0
    %292 = vmatpush.msra.mxu0 0.0
    %293 = vmatpush.msra.mxu0 0.0
    %294 = vmatpush.msra.mxu0 0.0
    %295 = vmatpush.msra.mxu0 0.0
    %296 = vmatpush.msra.mxu0 0.0
    %297 = vmatpush.msra.mxu0 0.0
    %298 = vmatpush.msra.mxu0 0.0
    %299 = vmatpush.msra.mxu0 0.0
    %300 = vmatpush.msra.mxu0 0.0
    %301 = vmatpush.msra.mxu0 %v281
    %302 = vmatmul.f32.gmra.mxu0 %v284
    %v303 = vpop.f32.mrf.mxu0
    %v304 = vadd.f32 0.0, %v303
    %305 = vdwg.mxu0
    %v306 = vrcp.pop %v278
    %v307 = vmul.f32 %v304, %v306
    %308 = vrot.lane.b32.xlu0 %v196, 120
    %v309 = vpop.permute.xlu0 %308
    %v310 = vsel %vm244, %v309, 0
    %312 = vmatpush.xpose.msra.mxu0 0.0
    %313 = vmatpush.xpose.msra.mxu0 0.0
    %314 = vmatpush.xpose.msra.mxu0 0.0
    %315 = vmatpush.xpose.msra.mxu0 0.0
    %316 = vmatpush.xpose.msra.mxu0 0.0
    %317 = vmatpush.xpose.msra.mxu0 0.0
    %318 = vmatpush.xpose.msra.mxu0 0.0
    %319 = vmatpush.xpose.msra.mxu0 0.0
    %320 = vmatpush.xpose.msra.mxu0 0.0
    %321 = vmatpush.xpose.msra.mxu0 0.0
    %322 = vmatpush.xpose.msra.mxu0 0.0
    %323 = vmatpush.xpose.msra.mxu0 0.0
    %324 = vmatpush.xpose.msra.mxu0 0.0
    %325 = vmatpush.xpose.msra.mxu0 0.0
    %326 = vmatpush.xpose.msra.mxu0 0.0
    %327 = vmatpush.xpose.msra.mxu0 %v248
    %328 = vmatmul.f32.gmra.mxu0 %v310
    %v329 = vpop.f32.mrf.mxu0
    %v330 = vadd.f32 %v240, %v329
    %331 = vdwg.mxu0
    %v332 = vsel %vm244, %v330, -inf
    %333 = vmax.xlane.f32.xlu0 %v332
    %v334 = vpop.xlane.xlu0 %333
    %v335 = vsub.f32 %v330, %v334
    %v336 = vmul.f32 %v335, 1.442695
    %v337 = vpow.pop %v336
    %v338 = vsel %vm244, %v337, 0.0
    %339 = vadd.xlane.f32.xlu0 %v338
    %v340 = vpop.xlane.xlu0 %339
    %v342 = vsel %vm244, %v337, 0
    %344 = vmatpush.msra.mxu0 0.0
    %345 = vmatpush.msra.mxu0 0.0
    %346 = vmatpush.msra.mxu0 0.0
    %347 = vmatpush.msra.mxu0 0.0
    %348 = vmatpush.msra.mxu0 0.0
    %349 = vmatpush.msra.mxu0 0.0
    %350 = vmatpush.msra.mxu0 0.0
    %351 = vmatpush.msra.mxu0 0.0
    %352 = vmatpush.msra.mxu0 0.0
    %353 = vmatpush.msra.mxu0 0.0
    %354 = vmatpush.msra.mxu0 0.0
    %355 = vmatpush.msra.mxu0 0.0
    %356 = vmatpush.msra.mxu0 0.0
    %357 = vmatpush.msra.mxu0 0.0
    %358 = vmatpush.msra.mxu0 0.0
    %359 = vmatpush.msra.mxu0 %v281
    %360 = vmatmul.f32.gmra.mxu0 %v342
    %v361 = vpop.f32.mrf.mxu0
    %v362 = vadd.f32 0.0, %v361
    %363 = vdwg.mxu0
    %v364 = vrcp.pop %v340
    %v365 = vmul.f32 %v362, %v364
    %366 = vrot.lane.b32.xlu0 %v196, 112
    %v367 = vpop.permute.xlu0 %366
    %368 = vrot.lane.b32.xlu0 %v230, 56
    %v369 = vpop.permute.xlu0 %368
    %v370 = vsel %vm244, %v367, 0
    %v372 = vsel %vm244, %v369, 0
    %374 = vmatpush.xpose.msra.mxu0 0.0
    %375 = vmatpush.xpose.msra.mxu0 0.0
    %376 = vmatpush.xpose.msra.mxu0 0.0
    %377 = vmatpush.xpose.msra.mxu0 0.0
    %378 = vmatpush.xpose.msra.mxu0 0.0
    %379 = vmatpush.xpose.msra.mxu0 0.0
    %380 = vmatpush.xpose.msra.mxu0 0.0
    %381 = vmatpush.xpose.msra.mxu0 0.0
    %382 = vmatpush.xpose.msra.mxu0 0.0
    %383 = vmatpush.xpose.msra.mxu0 0.0
    %384 = vmatpush.xpose.msra.mxu0 0.0
    %385 = vmatpush.xpose.msra.mxu0 0.0
    %386 = vmatpush.xpose.msra.mxu0 0.0
    %387 = vmatpush.xpose.msra.mxu0 0.0
    %388 = vmatpush.xpose.msra.mxu0 0.0
    %389 = vmatpush.xpose.msra.mxu0 %v372
    %390 = vmatmul.f32.gmra.mxu0 %v370
    %v391 = vpop.f32.mrf.mxu0
    %v392 = vadd.f32 %v240, %v391
    %393 = vdwg.mxu0
    %v394 = vsel %vm244, %v392, -inf
    %395 = vmax.xlane.f32.xlu0 %v394
    %v396 = vpop.xlane.xlu0 %395
    %v397 = vsub.f32 %v392, %v396
    %v398 = vmul.f32 %v397, 1.442695
    %v399 = vpow.pop %v398
    %v400 = vsel %vm244, %v399, 0.0
    %401 = vadd.xlane.f32.xlu0 %v400
    %v402 = vpop.xlane.xlu0 %401
    %403 = vrot.lane.b32.xlu0 %v167, 24
    %v404 = vpop.permute.xlu0 %403
    %v407 = vsel %vm244, %v399, 0
    %409 = vmatpush.msra.mxu0 0.0
    %410 = vmatpush.msra.mxu0 0.0
    %411 = vmatpush.msra.mxu0 0.0
    %412 = vmatpush.msra.mxu0 0.0
    %413 = vmatpush.msra.mxu0 0.0
    %414 = vmatpush.msra.mxu0 0.0
    %415 = vmatpush.msra.mxu0 0.0
    %416 = vmatpush.msra.mxu0 0.0
    %417 = vmatpush.msra.mxu0 0.0
    %418 = vmatpush.msra.mxu0 0.0
    %419 = vmatpush.msra.mxu0 0.0
    %420 = vmatpush.msra.mxu0 0.0
    %421 = vmatpush.msra.mxu0 0.0
    %422 = vmatpush.msra.mxu0 0.0
    %423 = vmatpush.msra.mxu0 0.0
    %424 = vmatpush.msra.mxu0 %v404
    %425 = vmatmul.f32.gmra.mxu0 %v407
    %v426 = vpop.f32.mrf.mxu0
    %v427 = vadd.f32 0.0, %v426
    %428 = vdwg.mxu0
    %v429 = vrcp.pop %v402
    %v430 = vmul.f32 %v427, %v429
    %431 = vrot.lane.b32.xlu0 %v196, 104
    %v432 = vpop.permute.xlu0 %431
    %v433 = vsel %vm244, %v432, 0
    %435 = vmatpush.xpose.msra.mxu0 0.0
    %436 = vmatpush.xpose.msra.mxu0 0.0
    %437 = vmatpush.xpose.msra.mxu0 0.0
    %438 = vmatpush.xpose.msra.mxu0 0.0
    %439 = vmatpush.xpose.msra.mxu0 0.0
    %440 = vmatpush.xpose.msra.mxu0 0.0
    %441 = vmatpush.xpose.msra.mxu0 0.0
    %442 = vmatpush.xpose.msra.mxu0 0.0
    %443 = vmatpush.xpose.msra.mxu0 0.0
    %444 = vmatpush.xpose.msra.mxu0 0.0
    %445 = vmatpush.xpose.msra.mxu0 0.0
    %446 = vmatpush.xpose.msra.mxu0 0.0
    %447 = vmatpush.xpose.msra.mxu0 0.0
    %448 = vmatpush.xpose.msra.mxu0 0.0
    %449 = vmatpush.xpose.msra.mxu0 0.0
    %450 = vmatpush.xpose.msra.mxu0 %v372
    %451 = vmatmul.f32.gmra.mxu0 %v433
    %v452 = vpop.f32.mrf.mxu0
    %v453 = vadd.f32 %v240, %v452
    %454 = vdwg.mxu0
    %v455 = vsel %vm244, %v453, -inf
    %456 = vmax.xlane.f32.xlu0 %v455
    %v457 = vpop.xlane.xlu0 %456
    %v458 = vsub.f32 %v453, %v457
    %v459 = vmul.f32 %v458, 1.442695
    %v460 = vpow.pop %v459
    %v461 = vsel %vm244, %v460, 0.0
    %462 = vadd.xlane.f32.xlu0 %v461
    %v463 = vpop.xlane.xlu0 %462
    %v465 = vsel %vm244, %v460, 0
    %467 = vmatpush.msra.mxu0 0.0
    %468 = vmatpush.msra.mxu0 0.0
    %469 = vmatpush.msra.mxu0 0.0
    %470 = vmatpush.msra.mxu0 0.0
    %471 = vmatpush.msra.mxu0 0.0
    %472 = vmatpush.msra.mxu0 0.0
    %473 = vmatpush.msra.mxu0 0.0
    %474 = vmatpush.msra.mxu0 0.0
    %475 = vmatpush.msra.mxu0 0.0
    %476 = vmatpush.msra.mxu0 0.0
    %477 = vmatpush.msra.mxu0 0.0
    %478 = vmatpush.msra.mxu0 0.0
    %479 = vmatpush.msra.mxu0 0.0
    %480 = vmatpush.msra.mxu0 0.0
    %481 = vmatpush.msra.mxu0 0.0
    %482 = vmatpush.msra.mxu0 %v404
    %483 = vmatmul.f32.gmra.mxu0 %v465
    %v484 = vpop.f32.mrf.mxu0
    %v485 = vadd.f32 0.0, %v484
    %486 = vdwg.mxu0
    %v487 = vrcp.pop %v463
    %v488 = vmul.f32 %v485, %v487
    %490 = vrot.lane.b32.xlu0 %v365, 8
    %v491 = vpop.permute.xlu0 %490
    %494 = vrot.lane.b32.xlu0 %v430, 16
    %v495 = vpop.permute.xlu0 %494
    %498 = vrot.lane.b32.xlu0 %v488, 24
    %v499 = vpop.permute.xlu0 %498
    %v501 = vsel %vm244, %v307, %v491
    %vm502 = vcmask 130048
    %v503 = vsel %vm502, %v501, %v495
    %vm504 = vcmask 195584
    %v505 = vsel %vm504, %v503, %v499
    %507 = vrot.lane.b32.xlu0 %v231, 64
    %v508 = vpop.permute.xlu0 %507
    %v510 = vsel %vm244, %v197, 0
    %v512 = vsel %vm244, %v508, 0
    %514 = vmatpush.xpose.msra.mxu0 0.0
    %515 = vmatpush.xpose.msra.mxu0 0.0
    %516 = vmatpush.xpose.msra.mxu0 0.0
    %517 = vmatpush.xpose.msra.mxu0 0.0
    %518 = vmatpush.xpose.msra.mxu0 0.0
    %519 = vmatpush.xpose.msra.mxu0 0.0
    %520 = vmatpush.xpose.msra.mxu0 0.0
    %521 = vmatpush.xpose.msra.mxu0 0.0
    %522 = vmatpush.xpose.msra.mxu0 0.0
    %523 = vmatpush.xpose.msra.mxu0 0.0
    %524 = vmatpush.xpose.msra.mxu0 0.0
    %525 = vmatpush.xpose.msra.mxu0 0.0
    %526 = vmatpush.xpose.msra.mxu0 0.0
    %527 = vmatpush.xpose.msra.mxu0 0.0
    %528 = vmatpush.xpose.msra.mxu0 0.0
    %529 = vmatpush.xpose.msra.mxu0 %v512
    %530 = vmatmul.f32.gmra.mxu0 %v510
    %v531 = vpop.f32.mrf.mxu0
    %v532 = vadd.f32 %v240, %v531
    %533 = vdwg.mxu0
    %v534 = vsel %vm244, %v532, -inf
    %535 = vmax.xlane.f32.xlu0 %v534
    %v536 = vpop.xlane.xlu0 %535
    %v537 = vsub.f32 %v532, %v536
    %v538 = vmul.f32 %v537, 1.442695
    %v539 = vpow.pop %v538
    %v540 = vsel %vm244, %v539, 0.0
    %541 = vadd.xlane.f32.xlu0 %v540
    %v542 = vpop.xlane.xlu0 %541
    %544 = vrot.lane.b32.xlu0 %v170, 32
    %v545 = vpop.permute.xlu0 %544
    %v548 = vsel %vm244, %v539, 0
    %550 = vmatpush.msra.mxu0 0.0
    %551 = vmatpush.msra.mxu0 0.0
    %552 = vmatpush.msra.mxu0 0.0
    %553 = vmatpush.msra.mxu0 0.0
    %554 = vmatpush.msra.mxu0 0.0
    %555 = vmatpush.msra.mxu0 0.0
    %556 = vmatpush.msra.mxu0 0.0
    %557 = vmatpush.msra.mxu0 0.0
    %558 = vmatpush.msra.mxu0 0.0
    %559 = vmatpush.msra.mxu0 0.0
    %560 = vmatpush.msra.mxu0 0.0
    %561 = vmatpush.msra.mxu0 0.0
    %562 = vmatpush.msra.mxu0 0.0
    %563 = vmatpush.msra.mxu0 0.0
    %564 = vmatpush.msra.mxu0 0.0
    %565 = vmatpush.msra.mxu0 %v545
    %566 = vmatmul.f32.gmra.mxu0 %v548
    %v567 = vpop.f32.mrf.mxu0
    %v568 = vadd.f32 0.0, %v567
    %569 = vdwg.mxu0
    %v570 = vrcp.pop %v542
    %v571 = vmul.f32 %v568, %v570
    %572 = vrot.lane.b32.xlu0 %v197, 120
    %v573 = vpop.permute.xlu0 %572
    %v574 = vsel %vm244, %v573, 0
    %576 = vmatpush.xpose.msra.mxu0 0.0
    %577 = vmatpush.xpose.msra.mxu0 0.0
    %578 = vmatpush.xpose.msra.mxu0 0.0
    %579 = vmatpush.xpose.msra.mxu0 0.0
    %580 = vmatpush.xpose.msra.mxu0 0.0
    %581 = vmatpush.xpose.msra.mxu0 0.0
    %582 = vmatpush.xpose.msra.mxu0 0.0
    %583 = vmatpush.xpose.msra.mxu0 0.0
    %584 = vmatpush.xpose.msra.mxu0 0.0
    %585 = vmatpush.xpose.msra.mxu0 0.0
    %586 = vmatpush.xpose.msra.mxu0 0.0
    %587 = vmatpush.xpose.msra.mxu0 0.0
    %588 = vmatpush.xpose.msra.mxu0 0.0
    %589 = vmatpush.xpose.msra.mxu0 0.0
    %590 = vmatpush.xpose.msra.mxu0 0.0
    %591 = vmatpush.xpose.msra.mxu0 %v512
    %592 = vmatmul.f32.gmra.mxu0 %v574
    %v593 = vpop.f32.mrf.mxu0
    %v594 = vadd.f32 %v240, %v593
    %595 = vdwg.mxu0
    %v596 = vsel %vm244, %v594, -inf
    %597 = vmax.xlane.f32.xlu0 %v596
    %v598 = vpop.xlane.xlu0 %597
    %v599 = vsub.f32 %v594, %v598
    %v600 = vmul.f32 %v599, 1.442695
    %v601 = vpow.pop %v600
    %v602 = vsel %vm244, %v601, 0.0
    %603 = vadd.xlane.f32.xlu0 %v602
    %v604 = vpop.xlane.xlu0 %603
    %v606 = vsel %vm244, %v601, 0
    %608 = vmatpush.msra.mxu0 0.0
    %609 = vmatpush.msra.mxu0 0.0
    %610 = vmatpush.msra.mxu0 0.0
    %611 = vmatpush.msra.mxu0 0.0
    %612 = vmatpush.msra.mxu0 0.0
    %613 = vmatpush.msra.mxu0 0.0
    %614 = vmatpush.msra.mxu0 0.0
    %615 = vmatpush.msra.mxu0 0.0
    %616 = vmatpush.msra.mxu0 0.0
    %617 = vmatpush.msra.mxu0 0.0
    %618 = vmatpush.msra.mxu0 0.0
    %619 = vmatpush.msra.mxu0 0.0
    %620 = vmatpush.msra.mxu0 0.0
    %621 = vmatpush.msra.mxu0 0.0
    %622 = vmatpush.msra.mxu0 0.0
    %623 = vmatpush.msra.mxu0 %v545
    %624 = vmatmul.f32.gmra.mxu0 %v606
    %v625 = vpop.f32.mrf.mxu0
    %v626 = vadd.f32 0.0, %v625
    %627 = vdwg.mxu0
    %v628 = vrcp.pop %v604
    %v629 = vmul.f32 %v626, %v628
    %630 = vrot.lane.b32.xlu0 %v197, 112
    %v631 = vpop.permute.xlu0 %630
    %632 = vrot.lane.b32.xlu0 %v231, 56
    %v633 = vpop.permute.xlu0 %632
    %v634 = vsel %vm244, %v631, 0
    %v636 = vsel %vm244, %v633, 0
    %638 = vmatpush.xpose.msra.mxu0 0.0
    %639 = vmatpush.xpose.msra.mxu0 0.0
    %640 = vmatpush.xpose.msra.mxu0 0.0
    %641 = vmatpush.xpose.msra.mxu0 0.0
    %642 = vmatpush.xpose.msra.mxu0 0.0
    %643 = vmatpush.xpose.msra.mxu0 0.0
    %644 = vmatpush.xpose.msra.mxu0 0.0
    %645 = vmatpush.xpose.msra.mxu0 0.0
    %646 = vmatpush.xpose.msra.mxu0 0.0
    %647 = vmatpush.xpose.msra.mxu0 0.0
    %648 = vmatpush.xpose.msra.mxu0 0.0
    %649 = vmatpush.xpose.msra.mxu0 0.0
    %650 = vmatpush.xpose.msra.mxu0 0.0
    %651 = vmatpush.xpose.msra.mxu0 0.0
    %652 = vmatpush.xpose.msra.mxu0 0.0
    %653 = vmatpush.xpose.msra.mxu0 %v636
    %654 = vmatmul.f32.gmra.mxu0 %v634
    %v655 = vpop.f32.mrf.mxu0
    %v656 = vadd.f32 %v240, %v655
    %657 = vdwg.mxu0
    %v658 = vsel %vm244, %v656, -inf
    %659 = vmax.xlane.f32.xlu0 %v658
    %v660 = vpop.xlane.xlu0 %659
    %v661 = vsub.f32 %v656, %v660
    %v662 = vmul.f32 %v661, 1.442695
    %v663 = vpow.pop %v662
    %v664 = vsel %vm244, %v663, 0.0
    %665 = vadd.xlane.f32.xlu0 %v664
    %v666 = vpop.xlane.xlu0 %665
    %667 = vrot.lane.b32.xlu0 %v170, 24
    %v668 = vpop.permute.xlu0 %667
    %v671 = vsel %vm244, %v663, 0
    %673 = vmatpush.msra.mxu0 0.0
    %674 = vmatpush.msra.mxu0 0.0
    %675 = vmatpush.msra.mxu0 0.0
    %676 = vmatpush.msra.mxu0 0.0
    %677 = vmatpush.msra.mxu0 0.0
    %678 = vmatpush.msra.mxu0 0.0
    %679 = vmatpush.msra.mxu0 0.0
    %680 = vmatpush.msra.mxu0 0.0
    %681 = vmatpush.msra.mxu0 0.0
    %682 = vmatpush.msra.mxu0 0.0
    %683 = vmatpush.msra.mxu0 0.0
    %684 = vmatpush.msra.mxu0 0.0
    %685 = vmatpush.msra.mxu0 0.0
    %686 = vmatpush.msra.mxu0 0.0
    %687 = vmatpush.msra.mxu0 0.0
    %688 = vmatpush.msra.mxu0 %v668
    %689 = vmatmul.f32.gmra.mxu0 %v671
    %v690 = vpop.f32.mrf.mxu0
    %v691 = vadd.f32 0.0, %v690
    %692 = vdwg.mxu0
    %v693 = vrcp.pop %v666
    %v694 = vmul.f32 %v691, %v693
    %695 = vrot.lane.b32.xlu0 %v197, 104
    %v696 = vpop.permute.xlu0 %695
    %v697 = vsel %vm244, %v696, 0
    %699 = vmatpush.xpose.msra.mxu0 0.0
    %700 = vmatpush.xpose.msra.mxu0 0.0
    %701 = vmatpush.xpose.msra.mxu0 0.0
    %702 = vmatpush.xpose.msra.mxu0 0.0
    %703 = vmatpush.xpose.msra.mxu0 0.0
    %704 = vmatpush.xpose.msra.mxu0 0.0
    %705 = vmatpush.xpose.msra.mxu0 0.0
    %706 = vmatpush.xpose.msra.mxu0 0.0
    %707 = vmatpush.xpose.msra.mxu0 0.0
    %708 = vmatpush.xpose.msra.mxu0 0.0
    %709 = vmatpush.xpose.msra.mxu0 0.0
    %710 = vmatpush.xpose.msra.mxu0 0.0
    %711 = vmatpush.xpose.msra.mxu0 0.0
    %712 = vmatpush.xpose.msra.mxu0 0.0
    %713 = vmatpush.xpose.msra.mxu0 0.0
    %714 = vmatpush.xpose.msra.mxu0 %v636
    %715 = vmatmul.f32.gmra.mxu0 %v697
    %v716 = vpop.f32.mrf.mxu0
    %v717 = vadd.f32 %v240, %v716
    %718 = vdwg.mxu0
    %v719 = vsel %vm244, %v717, -inf
    %720 = vmax.xlane.f32.xlu0 %v719
    %v721 = vpop.xlane.xlu0 %720
    %v722 = vsub.f32 %v717, %v721
    %v723 = vmul.f32 %v722, 1.442695
    %v724 = vpow.pop %v723
    %v725 = vsel %vm244, %v724, 0.0
    %726 = vadd.xlane.f32.xlu0 %v725
    %v727 = vpop.xlane.xlu0 %726
    %v729 = vsel %vm244, %v724, 0
    %731 = vmatpush.msra.mxu0 0.0
    %732 = vmatpush.msra.mxu0 0.0
    %733 = vmatpush.msra.mxu0 0.0
    %734 = vmatpush.msra.mxu0 0.0
    %735 = vmatpush.msra.mxu0 0.0
    %736 = vmatpush.msra.mxu0 0.0
    %737 = vmatpush.msra.mxu0 0.0
    %738 = vmatpush.msra.mxu0 0.0
    %739 = vmatpush.msra.mxu0 0.0
    %740 = vmatpush.msra.mxu0 0.0
    %741 = vmatpush.msra.mxu0 0.0
    %742 = vmatpush.msra.mxu0 0.0
    %743 = vmatpush.msra.mxu0 0.0
    %744 = vmatpush.msra.mxu0 0.0
    %745 = vmatpush.msra.mxu0 0.0
    %746 = vmatpush.msra.mxu0 %v668
    %747 = vmatmul.f32.gmra.mxu0 %v729
    %v748 = vpop.f32.mrf.mxu0
    %v749 = vadd.f32 0.0, %v748
    %750 = vdwg.mxu0
    %v751 = vrcp.pop %v727
    %v752 = vmul.f32 %v749, %v751
    %754 = vrot.lane.b32.xlu0 %v629, 8
    %v755 = vpop.permute.xlu0 %754
    %758 = vrot.lane.b32.xlu0 %v694, 16
    %v759 = vpop.permute.xlu0 %758
    %762 = vrot.lane.b32.xlu0 %v752, 24
    %v763 = vpop.permute.xlu0 %762
    %v765 = vsel %vm244, %v571, %v755
    %v766 = vsel %vm502, %v765, %v759
    %v767 = vsel %vm504, %v766, %v763
    %v768 = vld [vmem:[#allocation7] sm:$0xff]
    %v769 = vld [vmem:[#allocation7 + $0x8] sm:$0xff]
    %v770 = vld [vmem:[#allocation7 + $0x10] sm:$0xff]
    %v771 = vld [vmem:[#allocation7 + $0x18] sm:$0xff]
    %v773 = vsel %vm142, %v505, 0
    %v776 = vsel %vm142, %v767, 0
    %778 = vmatpush.msra.mxu0 0.0
    %779 = vmatpush.msra.mxu0 0.0
    %780 = vmatpush.msra.mxu0 0.0
    %781 = vmatpush.msra.mxu0 0.0
    %782 = vmatpush.msra.mxu0 0.0
    %783 = vmatpush.msra.mxu0 0.0
    %784 = vmatpush.msra.mxu0 0.0
    %785 = vmatpush.msra.mxu0 0.0
    %786 = vmatpush.msra.mxu0 0.0
    %787 = vmatpush.msra.mxu0 0.0
    %788 = vmatpush.msra.mxu0 0.0
    %789 = vmatpush.msra.mxu0 0.0
    %790 = vmatpush.msra.mxu0 %v771
    %791 = vmatpush.msra.mxu0 %v770
    %792 = vmatpush.msra.mxu0 %v769
    %793 = vmatpush.msra.mxu0 %v768
    %794 = vmatmul.f32.gmra.mxu0 %v773
    %v795 = vpop.f32.mrf.mxu0
    %v796 = vadd.f32 0.0, %v795
    %797 = vmatmul.f32.gmra.mxu0 %v776
    %v798 = vpop.f32.mrf.mxu0
    %v799 = vadd.f32 0.0, %v798
    %800 = vdwg.mxu0
    %801 = vst.msk [vmem:[#allocation14] sm:$0xff] %vm142, %v796
    %802 = vst.msk [vmem:[#allocation14 + $0x8] sm:$0xff] %vm142, %v799
    // Predicated region
    $region58: #{tpu_custom_call.1} parent=1 // pred_check
      _
    $region59: #{tpu_custom_call.1} parent=1 // pred_check_branch
      %804 = sbr.rel (0) target = $region61
    $region60: #{tpu_custom_call.1} parent=1 // pred_region
      %806 = vsyncadd [#allocation4], 0
      %s807 = sshll.u32 [#allocation14], 4
      %s808 = int_to_ptr.vmem [resolvable:$true] %s807
      %s809 = sshll.u32 %s7, 4
      %s810 = int_to_ptr.hbm [resolvable:$true] %s809
      %815 = dma.vmem_to_hbm [thread:$0]  %s808, 256, %s810, [#allocation4], 128, 128, 8
    $region61: #{tpu_custom_call.1} parent=1 // pred_fallthru
      _
    // Predicated region
    $region62: #{tpu_custom_call.1} parent=1 // pred_check
      _
    $region63: #{tpu_custom_call.1} parent=1 // pred_check_branch
      %817 = sbr.rel (0) target = $region65
    $region64: #{tpu_custom_call.1} parent=1 // pred_region
      %819 = dma.done [#allocation4], 256
    $region65: #{tpu_custom_call.1} parent=1 // pred_fallthru
      _
    %820 = vsyncpa [#allocation3], 1
    %821 = vsyncpa [#allocation6], 1
    %822 = vsyncpa [#allocation9], 1
    %823 = vsyncpa [#allocation12], 1
    %824 = vsyncpa [#allocation4], 1

</llo_original>
